<compile_context>
chip_gen: v5e
topology: v5e:2x2
jax: 0.10.0
libtpu: 0.0.40
codegen_flags: <defaults>
</compile_context>

<pallas_src>
import jax
import jax.numpy as jnp
from jax.experimental import pallas as pl
from jax.experimental.pallas import tpu as pltpu


def _embedding_block_kernel(x_ref, folded_ref, w_sc_ref, b_ref, o_ref):
    x_t = x_ref[...]                                   # (F, TN) f32, lane-dense
    num_classes = folded_ref.shape[1]                  # C = num_input_classes + 1
    tn = x_t.shape[1]

    # one-hot (transposed, (C, TN)) of the truncated integer index in row 0
    idx = x_t[0:1, :].astype(jnp.int32)                # (1, TN)
    class_ids = jax.lax.broadcasted_iota(jnp.int32, (num_classes, tn), 0)
    one_hot_t = (class_ids == idx).astype(jnp.float32)  # (C, TN)

    # embedding lookup + linear fused into one dot via the pre-folded table,
    # plus the scalar-feature contribution and the bias.
    out_t = jnp.dot(folded_ref[...], one_hot_t,
                    preferred_element_type=jnp.float32)          # (D_out, TN)
    out_t = out_t + jnp.dot(w_sc_ref[...], x_t[1:, :],
                            preferred_element_type=jnp.float32)  # (D_out, TN)
    out_t = out_t + b_ref[...]                                   # (D_out, 1) bcast

    o_ref[...] = out_t.astype(o_ref.dtype)


def embedding_block_forward(x, emb_table, weight, bias, *, tile_n=512):
    """x: [N, F] (or [N]) float32 with atom-type id in column 0;
    emb_table: [C+1, D_e]; weight: [D_out, D_e + F - 1] (torch nn.Linear layout);
    bias: [D_out].  Returns [N, D_out]."""
    if x.ndim == 1:
        x = x[:, None]
    n, f = x.shape
    num_classes, d_e = emb_table.shape
    d_out = weight.shape[0]
    assert weight.shape[1] == d_e + f - 1

    # torch Linear computes feats @ W.T + b; split W.T over [embedding | scalars]
    w_t = weight.T.astype(jnp.float32)                 # (D_e + F - 1, D_out)
    w_emb = w_t[:d_e]                                  # (D_e, D_out)
    w_sc = w_t[d_e:]                                   # (F - 1, D_out)

    # Fold the tiny embedding table through the linear layer once (host side):
    # emb @ W_emb == one_hot @ (emb_table @ W_emb)
    folded_t = (emb_table.astype(jnp.float32) @ w_emb).T   # (D_out, C)

    x_t = x.astype(jnp.float32).T                      # (F, N) lane-dense
    if f == 1:
        # degenerate 1-D-input case: no scalar features -> zero-contribution block
        x_t = jnp.concatenate([x_t, jnp.zeros((1, n), jnp.float32)], axis=0)
        w_sc = jnp.zeros((1, d_out), jnp.float32)
        f = 2
    w_sc_t = w_sc.T                                    # (D_out, F - 1)
    b2 = bias.astype(jnp.float32)[:, None]             # (D_out, 1)

    # Pad N up to a multiple of the (128-aligned) tile; padded nodes carry
    # index 0 + zero scalars and are sliced off after the call.
    n_pad = max(pl.cdiv(n, 128) * 128, 128)
    tn = max((min(tile_n, n_pad) // 128) * 128, 128)
    n_pad = pl.cdiv(n_pad, tn) * tn
    if n_pad != n:
        x_t = jnp.pad(x_t, ((0, 0), (0, n_pad - n)))

    grid = (n_pad // tn,)
    out_t = pl.pallas_call(
        _embedding_block_kernel,
        out_shape=jax.ShapeDtypeStruct((d_out, n_pad), jnp.float32),
        grid_spec=pltpu.PrefetchScalarGridSpec(
            num_scalar_prefetch=0,
            grid=grid,
            in_specs=[
                pl.BlockSpec((f, tn), lambda i: (0, i)),               # x tile
                pl.BlockSpec((d_out, num_classes), lambda i: (0, 0)),  # folded W
                pl.BlockSpec((d_out, f - 1), lambda i: (0, 0)),        # W_scalars
                pl.BlockSpec((d_out, 1), lambda i: (0, 0)),            # bias
            ],
            out_specs=pl.BlockSpec((d_out, tn), lambda i: (0, i)),
        ),
        compiler_params=pltpu.CompilerParams(
            dimension_semantics=("parallel",)),
    )(x_t, folded_t, w_sc_t, b2)

    # back to [N, D_out] outside the kernel (layout plumbing, not compute)
    return out_t.T[:n]


def reference_forward(x, emb_table, weight, bias):
    if x.ndim == 1:
        x = x[:, None]
    idx = x[:, 0].astype(jnp.int32)
    emb = emb_table[idx]
    feats = jnp.concatenate([emb, x[:, 1:]], axis=-1)
    return feats @ weight.T + bias


if __name__ == "__main__":
    # module hyper-parameters (small, consistent with the forward pass)
    init_node_embedding_dim = 32
    num_input_classes = 6
    num_scalar_input_features = 5        # 1 type column + 4 scalar features
    atom_type_embedding_dim = 8

    n_nodes = 300                        # not a multiple of 128 -> exercises padding
    key = jax.random.PRNGKey(0)
    k_emb, k_w, k_b, k_idx, k_sc = jax.random.split(key, 5)

    # deterministic "parameters"
    emb_table = jax.random.normal(
        k_emb, (num_input_classes + 1, atom_type_embedding_dim), jnp.float32)
    d_in = atom_type_embedding_dim + num_scalar_input_features - 1
    weight = jax.random.normal(
        k_w, (init_node_embedding_dim, d_in), jnp.float32) * 0.1
    bias = jax.random.normal(k_b, (init_node_embedding_dim,), jnp.float32) * 0.1

    # deterministic input: column 0 = atom type index (as float), rest = scalars
    idx = jax.random.randint(k_idx, (n_nodes, 1), 0, num_input_classes + 1)
    scalars = jax.random.normal(
        k_sc, (n_nodes, num_scalar_input_features - 1), jnp.float32)
    x = jnp.concatenate([idx.astype(jnp.float32), scalars], axis=-1)

    ref = reference_forward(x, emb_table, weight, bias)

    # default large tile (single grid step after clamping to padded N)
    out = jax.block_until_ready(embedding_block_forward(x, emb_table, weight, bias))
    assert out.shape == (n_nodes, init_node_embedding_dim)
    assert jnp.allclose(out, ref, atol=1e-4, rtol=1e-4), "mismatch (default tile)"

    # smaller tile -> multi-step grid path
    out2 = jax.block_until_ready(
        embedding_block_forward(x, emb_table, weight, bias, tile_n=128))
    assert jnp.allclose(out2, ref, atol=1e-4, rtol=1e-4), "mismatch (tile_n=128)"

    print("KERNEL_OK")
</pallas_src>

<mosaic_0001>
module attributes {stable_mosaic.version = 11 : i64} {
  func.func @_embedding_block_kernel(%arg0: i32, %arg1: memref<5x384xf32, #tpu.memory_space<vmem>>, %arg2: memref<32x7xf32, #tpu.memory_space<vmem>>, %arg3: memref<32x4xf32, #tpu.memory_space<vmem>>, %arg4: memref<32x1xf32, #tpu.memory_space<vmem>>, %arg5: memref<32x384xf32, #tpu.memory_space<vmem>>) attributes {dimension_semantics = [#tpu.dimension_semantics<parallel>], iteration_bounds = array<i64: 1>, scalar_prefetch = 0 : i64, scratch_operands = 0 : i64, tpu.core_type = #tpu.core_type<tc>, window_params = [{transform_indices = @transform_0, window_bounds = array<i64: 5, 384>}, {pipeline_mode = #tpu.pipeline_mode<synchronous>, transform_indices = @transform_1, window_bounds = array<i64: 32, 7>}, {pipeline_mode = #tpu.pipeline_mode<synchronous>, transform_indices = @transform_2, window_bounds = array<i64: 32, 4>}, {pipeline_mode = #tpu.pipeline_mode<synchronous>, transform_indices = @transform_3, window_bounds = array<i64: 32, 1>}, {transform_indices = @transform_4, window_bounds = array<i64: 32, 384>}]} {
    %c0 = arith.constant 0 : index
    %c0_0 = arith.constant 0 : index
    %0 = vector.load %arg1[%c0, %c0_0] : memref<5x384xf32, #tpu.memory_space<vmem>>, vector<5x384xf32>
    %1 = vector.extract_strided_slice %0 {offsets = [0, 0], sizes = [1, 384], strides = [1, 1]} : vector<5x384xf32> to vector<1x384xf32>
    %2 = arith.fptosi %1 : vector<1x384xf32> to vector<1x384xi32>
    %3 = tpu.iota {dimensions = array<i32: 0>} : vector<7x384xi32>
    %4 = vector.broadcast %2 : vector<1x384xi32> to vector<7x384xi32>
    %5 = arith.cmpi eq, %3, %4 : vector<7x384xi32>
    %6 = arith.extui %5 : vector<7x384xi1> to vector<7x384xi32>
    %7 = arith.sitofp %6 : vector<7x384xi32> to vector<7x384xf32>
    %c0_1 = arith.constant 0 : index
    %c0_2 = arith.constant 0 : index
    %8 = vector.load %arg2[%c0_1, %c0_2] : memref<32x7xf32, #tpu.memory_space<vmem>>, vector<32x7xf32>
    %cst = arith.constant dense<0.000000e+00> : vector<32x384xf32>
    %9 = tpu.matmul %8, %7, %cst {dimension_numbers = #tpu.dot_dimension_numbers<[1], [0], [0], [1], [0, 0, 1, 1], [], []>} : vector<32x7xf32>, vector<7x384xf32>, vector<32x384xf32> -> vector<32x384xf32>
    %c0_3 = arith.constant 0 : index
    %c0_4 = arith.constant 0 : index
    %10 = vector.load %arg3[%c0_3, %c0_4] : memref<32x4xf32, #tpu.memory_space<vmem>>, vector<32x4xf32>
    %11 = vector.extract_strided_slice %0 {offsets = [1, 0], sizes = [4, 384], strides = [1, 1]} : vector<5x384xf32> to vector<4x384xf32>
    %cst_5 = arith.constant dense<0.000000e+00> : vector<32x384xf32>
    %12 = tpu.matmul %10, %11, %cst_5 {dimension_numbers = #tpu.dot_dimension_numbers<[1], [0], [0], [1], [0, 0, 1, 1], [], []>} : vector<32x4xf32>, vector<4x384xf32>, vector<32x384xf32> -> vector<32x384xf32>
    %13 = arith.addf %9, %12 : vector<32x384xf32>
    %c0_6 = arith.constant 0 : index
    %c0_7 = arith.constant 0 : index
    %14 = vector.load %arg4[%c0_6, %c0_7] : memref<32x1xf32, #tpu.memory_space<vmem>>, vector<32x1xf32>
    %15 = vector.broadcast %14 : vector<32x1xf32> to vector<32x384xf32>
    %16 = arith.addf %13, %15 : vector<32x384xf32>
    %c0_8 = arith.constant 0 : index
    %c0_9 = arith.constant 0 : index
    %17 = vector.load %arg5[%c0_8, %c0_9] : memref<32x384xf32, #tpu.memory_space<vmem>>, vector<32x384xf32>
    tpu.vector_store %arg5[%c0_8, %c0_9], %16 {strides = array<i32>} : memref<32x384xf32, #tpu.memory_space<vmem>>, vector<32x384xf32>,
    return
  }
  func.func @transform_0(%arg0: i32) -> (i32, i32) {
    %c0_i32 = arith.constant 0 : i32
    %c0_i32_0 = arith.constant 0 : i32
    return %c0_i32, %arg0 : i32, i32
  }
  func.func @transform_1(%arg0: i32) -> (i32, i32) {
    %c0_i32 = arith.constant 0 : i32
    %c0_i32_0 = arith.constant 0 : i32
    %c0_i32_1 = arith.constant 0 : i32
    return %c0_i32, %c0_i32_0 : i32, i32
  }
  func.func @transform_2(%arg0: i32) -> (i32, i32) {
    %c0_i32 = arith.constant 0 : i32
    %c0_i32_0 = arith.constant 0 : i32
    %c0_i32_1 = arith.constant 0 : i32
    return %c0_i32, %c0_i32_0 : i32, i32
  }
  func.func @transform_3(%arg0: i32) -> (i32, i32) {
    %c0_i32 = arith.constant 0 : i32
    %c0_i32_0 = arith.constant 0 : i32
    %c0_i32_1 = arith.constant 0 : i32
    return %c0_i32, %c0_i32_0 : i32, i32
  }
  func.func @transform_4(%arg0: i32) -> (i32, i32) {
    %c0_i32 = arith.constant 0 : i32
    %c0_i32_0 = arith.constant 0 : i32
    return %c0_i32, %arg0 : i32, i32
  }
}

</mosaic_0001>

<llo_original>
// kernel: tpu_custom_call.1
$region0: #{tpu_custom_call.1}
  #allocation0 [shape = 'u32[]', space=smem, size = 0x4, offset = 0x4, fixed_abs, tag = 'smem constant byte address 0x4 - core index']
  #allocation1 [shape = 'u32[72,128]{1,0:T(1,128)}', space=vmem, size = 0x9000, scoped, tag = 'internal scratch']
  %s0 = inlined_call_operand.vmem [shape: f32[5,384], index: 0, kind: input, shape index: {}]
  %s1 = inlined_call_operand.vmem [shape: f32[32,7], index: 1, kind: input, shape index: {}]
  %s2 = inlined_call_operand.vmem [shape: f32[32,4], index: 2, kind: input, shape index: {}]
  %s3 = inlined_call_operand.vmem [shape: f32[32,1], index: 3, kind: input, shape index: {}]
  %s4 = inlined_call_operand.hbm [shape: f32[32,384], index: 4, kind: output, shape index: {}]
  %s5 = sld [smem:[#allocation0]]
  $region26: #{tpu_custom_call.1} parent=0
    _
  %s7 = ssub.s32 1, %s5
  %s8 = scalar_select 0, %s7, %s5
  $region1: #{tpu_custom_call.1} parent=0
    #allocation2 [shape = 'u8[49152]{0}', space=vmem, size = 0xc000, scoped, tag = 'output window, operand 0, single buffered']
    #allocation3 [shape = 's32[1]{0}', space=sflag, size = 0x4, scoped, tag = 'scoped memory for tpu_custom_call.1']
    %9 = vsyncpa [#allocation3], 0
    // Predicated region
    $region2: #{tpu_custom_call.1} parent=1 // pred_check
      _
    $region3: #{tpu_custom_call.1} parent=1 // pred_check_branch
      %11 = sbr.rel (0) target = $region5
    $region4: #{tpu_custom_call.1} parent=1 // pred_region
      _
    $region5: #{tpu_custom_call.1} parent=1 // pred_fallthru
      _
    // Predicated region
    $region6: #{tpu_custom_call.1} parent=1 // pred_check
      _
    $region7: #{tpu_custom_call.1} parent=1 // pred_check_branch
      %13 = sbr.rel (0) target = $region9
    $region8: #{tpu_custom_call.1} parent=1 // pred_region
      _
    $region9: #{tpu_custom_call.1} parent=1 // pred_fallthru
      _
    // Predicated region
    $region10: #{tpu_custom_call.1} parent=1 // pred_check
      _
    $region11: #{tpu_custom_call.1} parent=1 // pred_check_branch
      %15 = sbr.rel (0) target = $region13
    $region12: #{tpu_custom_call.1} parent=1 // pred_region
      _
    $region13: #{tpu_custom_call.1} parent=1 // pred_fallthru
      _
    // Predicated region
    $region14: #{tpu_custom_call.1} parent=1 // pred_check
      _
    $region15: #{tpu_custom_call.1} parent=1 // pred_check_branch
      %17 = sbr.rel (0) target = $region17
    $region16: #{tpu_custom_call.1} parent=1 // pred_region
      _
    $region17: #{tpu_custom_call.1} parent=1 // pred_fallthru
      _
    %v18 = vld [vmem:[%s0] sm:$0x1f]
    %v19 = vld [vmem:[%s0 + $0x8] sm:$0x1f]
    %v20 = vld [vmem:[%s0 + $0x10] sm:$0x1f]
    %v21 = vcvt.f32.s32.to.zero.pseudo %v18
    %v22 = vcvt.f32.s32.to.zero.pseudo %v19
    %v23 = vcvt.f32.s32.to.zero.pseudo %v20
    %v24 = vlaneseq
    %v25 = vshrl.u32 %v24, 7
    %v26 = vperm.slane %v21, 0
    %v27 = vperm.slane %v22, 0
    %v28 = vperm.slane %v23, 0
    %vm29 = vcmp.eq.s32.totalorder %v25, %v26
    %vm30 = vcmp.eq.s32.totalorder %v25, %v27
    %vm31 = vcmp.eq.s32.totalorder %v25, %v28
    %v32 = vsel %vm29, 1, 0
    %v33 = vsel %vm30, 1, 0
    %v34 = vsel %vm31, 1, 0
    %v35 = vcvt.s32.f32 %v32
    %v36 = vcvt.s32.f32 %v33
    %v37 = vcvt.s32.f32 %v34
    %v38 = vld [vmem:[%s1] sm:$0xff]
    %v39 = vld [vmem:[%s1 + $0x8] sm:$0xff]
    %v40 = vld [vmem:[%s1 + $0x10] sm:$0xff]
    %v41 = vld [vmem:[%s1 + $0x18] sm:$0xff]
    %v42 = vld [vmem:[%s2] sm:$0xff]
    %v43 = vld [vmem:[%s2 + $0x8] sm:$0xff]
    %v44 = vld [vmem:[%s2 + $0x10] sm:$0xff]
    %v45 = vld [vmem:[%s2 + $0x18] sm:$0xff]
    %v49 = vrot.slane %v18, 1
    %v50 = vrot.slane %v19, 1
    %v51 = vrot.slane %v20, 1
    %vm52 = vcmask 31744
    %v54 = vsel %vm52, %v42, 0
    %v57 = vsel %vm52, %v43, 0
    %v60 = vsel %vm52, %v44, 0
    %v63 = vsel %vm52, %v45, 0
    %vm65 = vcmask 1043456
    %v66 = vsel %vm65, %v49, 0
    %v68 = vsel %vm65, %v50, 0
    %v70 = vsel %vm65, %v51, 0
    %72 = vmatpush.msra.mxu0 0.0
    %73 = vmatpush.msra.mxu0 0.0
    %74 = vmatpush.msra.mxu0 0.0
    %75 = vmatpush.msra.mxu0 0.0
    %76 = vmatpush.msra.mxu0 0.0
    %77 = vmatpush.msra.mxu0 0.0
    %78 = vmatpush.msra.mxu0 0.0
    %79 = vmatpush.msra.mxu0 0.0
    %80 = vmatpush.msra.mxu0 0.0
    %81 = vmatpush.msra.mxu0 0.0
    %82 = vmatpush.msra.mxu0 0.0
    %83 = vmatpush.msra.mxu0 0.0
    %84 = vmatpush.msra.mxu0 0.0
    %85 = vmatpush.msra.mxu0 0.0
    %86 = vmatpush.msra.mxu0 0.0
    %87 = vmatpush.msra.mxu0 %v66
    %88 = vmatmul.f32.gmra.mxu0 %v54
    %v89 = vpop.f32.mrf.mxu0
    %v90 = vadd.f32 0.0, %v89
    %91 = vmatmul.f32.gmra.mxu0 %v57
    %v92 = vpop.f32.mrf.mxu0
    %v93 = vadd.f32 0.0, %v92
    %94 = vmatmul.f32.gmra.mxu0 %v60
    %v95 = vpop.f32.mrf.mxu0
    %v96 = vadd.f32 0.0, %v95
    %97 = vmatmul.f32.gmra.mxu0 %v63
    %v98 = vpop.f32.mrf.mxu0
    %v99 = vadd.f32 0.0, %v98
    %100 = vdwg.mxu0
    %101 = vmatpush.msra.mxu0 0.0
    %102 = vmatpush.msra.mxu0 0.0
    %103 = vmatpush.msra.mxu0 0.0
    %104 = vmatpush.msra.mxu0 0.0
    %105 = vmatpush.msra.mxu0 0.0
    %106 = vmatpush.msra.mxu0 0.0
    %107 = vmatpush.msra.mxu0 0.0
    %108 = vmatpush.msra.mxu0 0.0
    %109 = vmatpush.msra.mxu0 0.0
    %110 = vmatpush.msra.mxu0 0.0
    %111 = vmatpush.msra.mxu0 0.0
    %112 = vmatpush.msra.mxu0 0.0
    %113 = vmatpush.msra.mxu0 0.0
    %114 = vmatpush.msra.mxu0 0.0
    %115 = vmatpush.msra.mxu0 0.0
    %116 = vmatpush.msra.mxu0 %v68
    %117 = vmatmul.f32.gmra.mxu0 %v54
    %v118 = vpop.f32.mrf.mxu0
    %v119 = vadd.f32 0.0, %v118
    %120 = vmatmul.f32.gmra.mxu0 %v57
    %v121 = vpop.f32.mrf.mxu0
    %v122 = vadd.f32 0.0, %v121
    %123 = vmatmul.f32.gmra.mxu0 %v60
    %v124 = vpop.f32.mrf.mxu0
    %v125 = vadd.f32 0.0, %v124
    %126 = vmatmul.f32.gmra.mxu0 %v63
    %v127 = vpop.f32.mrf.mxu0
    %v128 = vadd.f32 0.0, %v127
    %129 = vdwg.mxu0
    %130 = vmatpush.msra.mxu0 0.0
    %131 = vmatpush.msra.mxu0 0.0
    %132 = vmatpush.msra.mxu0 0.0
    %133 = vmatpush.msra.mxu0 0.0
    %134 = vmatpush.msra.mxu0 0.0
    %135 = vmatpush.msra.mxu0 0.0
    %136 = vmatpush.msra.mxu0 0.0
    %137 = vmatpush.msra.mxu0 0.0
    %138 = vmatpush.msra.mxu0 0.0
    %139 = vmatpush.msra.mxu0 0.0
    %140 = vmatpush.msra.mxu0 0.0
    %141 = vmatpush.msra.mxu0 0.0
    %142 = vmatpush.msra.mxu0 0.0
    %143 = vmatpush.msra.mxu0 0.0
    %144 = vmatpush.msra.mxu0 0.0
    %145 = vmatpush.msra.mxu0 %v70
    %146 = vmatmul.f32.gmra.mxu0 %v54
    %v147 = vpop.f32.mrf.mxu0
    %v148 = vadd.f32 0.0, %v147
    %149 = vmatmul.f32.gmra.mxu0 %v57
    %v150 = vpop.f32.mrf.mxu0
    %v151 = vadd.f32 0.0, %v150
    %152 = vmatmul.f32.gmra.mxu0 %v60
    %v153 = vpop.f32.mrf.mxu0
    %v154 = vadd.f32 0.0, %v153
    %155 = vmatmul.f32.gmra.mxu0 %v63
    %v156 = vpop.f32.mrf.mxu0
    %v157 = vadd.f32 0.0, %v156
    %158 = vdwg.mxu0
    %vm159 = vcmask 56320
    %v161 = vsel %vm159, %v38, 0
    %v164 = vsel %vm159, %v39, 0
    %v167 = vsel %vm159, %v40, 0
    %v170 = vsel %vm159, %v41, 0
    %vm172 = vcmask 1046528
    %v174 = vsel %vm172, %v35, 0
    %v177 = vsel %vm172, %v36, 0
    %v180 = vsel %vm172, %v37, 0
    %182 = vmatpush.msra.mxu0 0.0
    %183 = vmatpush.msra.mxu0 0.0
    %184 = vmatpush.msra.mxu0 0.0
    %185 = vmatpush.msra.mxu0 0.0
    %186 = vmatpush.msra.mxu0 0.0
    %187 = vmatpush.msra.mxu0 0.0
    %188 = vmatpush.msra.mxu0 0.0
    %189 = vmatpush.msra.mxu0 0.0
    %190 = vmatpush.msra.mxu0 0.0
    %191 = vmatpush.msra.mxu0 0.0
    %192 = vmatpush.msra.mxu0 0.0
    %193 = vmatpush.msra.mxu0 0.0
    %194 = vmatpush.msra.mxu0 0.0
    %195 = vmatpush.msra.mxu0 0.0
    %196 = vmatpush.msra.mxu0 0.0
    %197 = vmatpush.msra.mxu0 %v174
    %198 = vmatmul.f32.gmra.mxu0 %v161
    %v199 = vpop.f32.mrf.mxu0
    %v200 = vadd.f32 %v90, %v199
    %201 = vmatmul.f32.gmra.mxu0 %v164
    %v202 = vpop.f32.mrf.mxu0
    %v203 = vadd.f32 %v93, %v202
    %204 = vmatmul.f32.gmra.mxu0 %v167
    %v205 = vpop.f32.mrf.mxu0
    %v206 = vadd.f32 %v96, %v205
    %207 = vmatmul.f32.gmra.mxu0 %v170
    %v208 = vpop.f32.mrf.mxu0
    %v209 = vadd.f32 %v99, %v208
    %210 = vdwg.mxu0
    %211 = vmatpush.msra.mxu0 0.0
    %212 = vmatpush.msra.mxu0 0.0
    %213 = vmatpush.msra.mxu0 0.0
    %214 = vmatpush.msra.mxu0 0.0
    %215 = vmatpush.msra.mxu0 0.0
    %216 = vmatpush.msra.mxu0 0.0
    %217 = vmatpush.msra.mxu0 0.0
    %218 = vmatpush.msra.mxu0 0.0
    %219 = vmatpush.msra.mxu0 0.0
    %220 = vmatpush.msra.mxu0 0.0
    %221 = vmatpush.msra.mxu0 0.0
    %222 = vmatpush.msra.mxu0 0.0
    %223 = vmatpush.msra.mxu0 0.0
    %224 = vmatpush.msra.mxu0 0.0
    %225 = vmatpush.msra.mxu0 0.0
    %226 = vmatpush.msra.mxu0 %v177
    %227 = vmatmul.f32.gmra.mxu0 %v161
    %v228 = vpop.f32.mrf.mxu0
    %v229 = vadd.f32 %v119, %v228
    %230 = vmatmul.f32.gmra.mxu0 %v164
    %v231 = vpop.f32.mrf.mxu0
    %v232 = vadd.f32 %v122, %v231
    %233 = vmatmul.f32.gmra.mxu0 %v167
    %v234 = vpop.f32.mrf.mxu0
    %v235 = vadd.f32 %v125, %v234
    %236 = vmatmul.f32.gmra.mxu0 %v170
    %v237 = vpop.f32.mrf.mxu0
    %v238 = vadd.f32 %v128, %v237
    %239 = vdwg.mxu0
    %240 = vmatpush.msra.mxu0 0.0
    %241 = vmatpush.msra.mxu0 0.0
    %242 = vmatpush.msra.mxu0 0.0
    %243 = vmatpush.msra.mxu0 0.0
    %244 = vmatpush.msra.mxu0 0.0
    %245 = vmatpush.msra.mxu0 0.0
    %246 = vmatpush.msra.mxu0 0.0
    %247 = vmatpush.msra.mxu0 0.0
    %248 = vmatpush.msra.mxu0 0.0
    %249 = vmatpush.msra.mxu0 0.0
    %250 = vmatpush.msra.mxu0 0.0
    %251 = vmatpush.msra.mxu0 0.0
    %252 = vmatpush.msra.mxu0 0.0
    %253 = vmatpush.msra.mxu0 0.0
    %254 = vmatpush.msra.mxu0 0.0
    %255 = vmatpush.msra.mxu0 %v180
    %256 = vmatmul.f32.gmra.mxu0 %v161
    %v257 = vpop.f32.mrf.mxu0
    %v258 = vadd.f32 %v148, %v257
    %259 = vmatmul.f32.gmra.mxu0 %v164
    %v260 = vpop.f32.mrf.mxu0
    %v261 = vadd.f32 %v151, %v260
    %262 = vmatmul.f32.gmra.mxu0 %v167
    %v263 = vpop.f32.mrf.mxu0
    %v264 = vadd.f32 %v154, %v263
    %265 = vmatmul.f32.gmra.mxu0 %v170
    %v266 = vpop.f32.mrf.mxu0
    %v267 = vadd.f32 %v157, %v266
    %268 = vdwg.mxu0
    %v269 = vld [vmem:[%s3] sm:$0xff]
    %v270 = vld [vmem:[%s3 + $0x8] sm:$0xff]
    %v271 = vld [vmem:[%s3 + $0x10] sm:$0xff]
    %v272 = vld [vmem:[%s3 + $0x18] sm:$0xff]
    %274 = vset.pattern.permute.xlu0 0
    %275 = vperm.xlu0 %274, %v269
    %v276 = vpop.permute.xlu0 %275
    %279 = vset.pattern.permute.xlu0 0
    %280 = vperm.xlu0 %279, %v270
    %v281 = vpop.permute.xlu0 %280
    %284 = vset.pattern.permute.xlu0 0
    %285 = vperm.xlu0 %284, %v271
    %v286 = vpop.permute.xlu0 %285
    %289 = vset.pattern.permute.xlu0 0
    %290 = vperm.xlu0 %289, %v272
    %v291 = vpop.permute.xlu0 %290
    %v293 = vadd.f32 %v200, %v276
    %v294 = vadd.f32 %v229, %v276
    %v295 = vadd.f32 %v258, %v276
    %v296 = vadd.f32 %v203, %v281
    %v297 = vadd.f32 %v232, %v281
    %v298 = vadd.f32 %v261, %v281
    %v299 = vadd.f32 %v206, %v286
    %v300 = vadd.f32 %v235, %v286
    %v301 = vadd.f32 %v264, %v286
    %v302 = vadd.f32 %v209, %v291
    %v303 = vadd.f32 %v238, %v291
    %v304 = vadd.f32 %v267, %v291
    %305 = vst [vmem:[#allocation2] sm:$0xff] %v293
    %306 = vst [vmem:[#allocation2 + $0x8] sm:$0xff] %v294
    %307 = vst [vmem:[#allocation2 + $0x10] sm:$0xff] %v295
    %308 = vst [vmem:[#allocation2 + $0x18] sm:$0xff] %v296
    %309 = vst [vmem:[#allocation2 + $0x20] sm:$0xff] %v297
    %310 = vst [vmem:[#allocation2 + $0x28] sm:$0xff] %v298
    %311 = vst [vmem:[#allocation2 + $0x30] sm:$0xff] %v299
    %312 = vst [vmem:[#allocation2 + $0x38] sm:$0xff] %v300
    %313 = vst [vmem:[#allocation2 + $0x40] sm:$0xff] %v301
    %314 = vst [vmem:[#allocation2 + $0x48] sm:$0xff] %v302
    %315 = vst [vmem:[#allocation2 + $0x50] sm:$0xff] %v303
    %316 = vst [vmem:[#allocation2 + $0x58] sm:$0xff] %v304
    // Predicated region
    $region18: #{tpu_custom_call.1} parent=1 // pred_check
      _
    $region19: #{tpu_custom_call.1} parent=1 // pred_check_branch
      %318 = sbr.rel (0) target = $region21
    $region20: #{tpu_custom_call.1} parent=1 // pred_region
      %320 = vsyncadd [#allocation3], 0
      %s321 = sshll.u32 [#allocation2], 4
      %s322 = int_to_ptr.vmem [resolvable:$true] %s321
      %s323 = sshll.u32 %s4, 4
      %s324 = int_to_ptr.hbm [resolvable:$true] %s323
      %329 = dma.vmem_to_hbm [thread:$0]  %s322, 1536, %s324, [#allocation3], 384, 384, 24
    $region21: #{tpu_custom_call.1} parent=1 // pred_fallthru
      _
    // Predicated region
    $region22: #{tpu_custom_call.1} parent=1 // pred_check
      _
    $region23: #{tpu_custom_call.1} parent=1 // pred_check_branch
      %331 = sbr.rel (0) target = $region25
    $region24: #{tpu_custom_call.1} parent=1 // pred_region
      %333 = dma.done [#allocation3], 1536
    $region25: #{tpu_custom_call.1} parent=1 // pred_fallthru
      _
    %334 = vsyncpa [#allocation3], 1

</llo_original>
